<compile_context>
chip_gen: v5e
topology: v5e:2x2
jax: 0.10.0
libtpu: 0.0.40
codegen_flags: <defaults>
</compile_context>

<pallas_src>
import math

import jax
import jax.numpy as jnp
from jax import lax
from jax.experimental import pallas as pl
from jax.experimental.pallas import tpu as pltpu

KSIZE = 4    # len((1, 3, 3, 1))
STRIDE = 2

# Separable taps (1, 3, 3, 1); total 2-D normalization is 1/64 applied once.
_INV64 = 1.0 / 64.0


def _calc_same_pad(i: int, k: int, s: int) -> int:
    return max((math.ceil(i / s) - 1) * s + (k - 1) + 1 - i, 0)


def _blur_kernel(xm_ref, xh_ref, o_ref):
    """One (channel-block, row-block) tile.

    xm_ref: VMEM (2, 2, OHB, Wh, Cb)  phases [p, q, i, j, c] = xpad[2i+p, 2j+q, c]
            for H-half rows i in [r*OHB, (r+1)*OHB)
    xh_ref: VMEM (2, 2, 1,   Wh, Cb)  halo H-half row i = (r+1)*OHB
    o_ref : VMEM (OHB, OW, Cb)        OW = Wh - 1
    """
    ohb = o_ref.shape[0]

    def horiz(ref, p):
        # Unnormalized horizontal pass for H-phase p:
        #   h[i, ox, c] = sum_kw k1[kw] * xpad[2i+p, 2ox+kw, c],  k1 = (1,3,3,1)
        x_even = ref[p, 0]                       # (rows, Wh, Cb)  W-even phase
        x_odd = ref[p, 1]                        # (rows, Wh, Cb)  W-odd  phase
        return ((x_even[:, :-1, :] + x_odd[:, 1:, :])
                + 3.0 * (x_odd[:, :-1, :] + x_even[:, 1:, :]))

    h0 = horiz(xm_ref, 0)                        # (OHB, OW, Cb)  rows xpad[2i]
    h1 = horiz(xm_ref, 1)                        # (OHB, OW, Cb)  rows xpad[2i+1]
    g0 = horiz(xh_ref, 0)                        # (1,   OW, Cb)  halo even row
    g1 = horiz(xh_ref, 1)                        # (1,   OW, Cb)  halo odd  row

    # Unnormalized vertical pass:
    #   out[oy] = h0[oy] + 3*h1[oy] + 3*h0[oy+1] + h1[oy+1]
    # then one final 1/64 scale.
    if ohb > 1:
        o_ref[0:ohb - 1] = (
            ((h0[:-1] + h1[1:]) + 3.0 * (h1[:-1] + h0[1:])) * _INV64
        ).astype(o_ref.dtype)
    o_ref[ohb - 1:ohb] = (
        ((h0[ohb - 1:ohb] + g1) + 3.0 * (h1[ohb - 1:ohb] + g0)) * _INV64
    ).astype(o_ref.dtype)


def blur_block(x: jnp.ndarray, *, row_block_cap: int | None = None) -> jnp.ndarray:
    """Pallas implementation of BlurBlock.forward.  x is NCHW float32."""
    x = x.astype(jnp.float32)
    n, c, ih, iw = x.shape
    pad_h = _calc_same_pad(ih, KSIZE, STRIDE)
    pad_w = _calc_same_pad(iw, KSIZE, STRIDE)

    # Zero "same" padding (matches F.pad default).  Kept in the wrapper; XLA
    # fuses it with the (required) channels-last relayout.
    x_pad = jnp.pad(
        x,
        ((0, 0), (0, 0),
         (pad_h // 2, pad_h - pad_h // 2),
         (pad_w // 2, pad_w - pad_w // 2)),
    )
    hp, wp = x_pad.shape[-2:]
    assert hp % 2 == 0 and wp % 2 == 0  # always true for k=4, s=2 same-pad
    hh, wh = hp // 2, wp // 2
    oh, ow = hh - 1, wh - 1
    nc = n * c

    # Single relayout pass: space-to-depth + channels-last in one transpose.
    # x_ph[p, q, i, j, n*c] == x_pad[n, c, 2i+p, 2j+q]
    x_ph = (x_pad.reshape(n, c, hh, 2, wh, 2)
            .transpose(3, 5, 2, 4, 0, 1)
            .reshape(2, 2, hh, wh, nc))

    # ---- block sizing ------------------------------------------------------
    budget = 8 * 1024 * 1024   # per-step bytes; x2 for double-buffering -> <=16 MiB

    def step_bytes(ohb, cb):
        main = 2 * 2 * ohb * wh * cb
        halo = 2 * 2 * 1 * wh * cb
        out = ohb * ow * cb
        return 4 * (main + halo + out)

    # Lane (last) dim: full NC, or the largest >=128 multiple dividing NC
    # whose single-row step still fits the budget.
    if nc % 128 == 0:
        cands = [cb for cb in (512, 384, 256, 128) if nc % cb == 0]
        c_blk = cands[-1]
        for cb in cands:
            if step_bytes(1, cb) <= budget:
                c_blk = cb
                break
    else:
        c_blk = nc

    # Row blocking: largest divisor of OH whose per-step footprint stays under
    # the budget (so the pipeline fits every generation's scoped VMEM).
    cap = oh if row_block_cap is None else max(1, min(oh, row_block_cap))
    oh_blk = 1
    for d in range(1, cap + 1):
        if oh % d == 0 and step_bytes(d, c_blk) <= budget:
            oh_blk = d

    grid = (nc // c_blk, oh // oh_blk)

    cost = pl.CostEstimate(
        flops=int(14 * oh * ow * nc),
        transcendentals=0,
        bytes_accessed=int(4 * nc * (hp * wp + oh * ow)),
    )

    out_chlast = pl.pallas_call(
        _blur_kernel,
        out_shape=jax.ShapeDtypeStruct((oh, ow, nc), jnp.float32),
        grid=grid,
        in_specs=[
            # main rows: H-half indices [r*oh_blk, (r+1)*oh_blk)
            pl.BlockSpec((2, 2, oh_blk, wh, c_blk),
                         lambda cb, r: (0, 0, r, 0, cb)),
            # halo row: H-half index (r+1)*oh_blk  (always < hh since oh = hh-1)
            pl.BlockSpec((2, 2, 1, wh, c_blk),
                         lambda cb, r: (0, 0, (r + 1) * oh_blk, 0, cb)),
        ],
        out_specs=pl.BlockSpec((oh_blk, ow, c_blk),
                               lambda cb, r: (r, 0, cb)),
        compiler_params=pltpu.CompilerParams(
            dimension_semantics=("parallel", "parallel"),
            vmem_limit_bytes=48 * 1024 * 1024),
        cost_estimate=cost,
    )(x_ph, x_ph)

    # Back to NCHW for the public API (output is 1/4 the input spatial size).
    return out_chlast.reshape(oh, ow, n, c).transpose(2, 3, 0, 1)


def blur_block_reference(x: jnp.ndarray) -> jnp.ndarray:
    """Pure-JAX reference mirroring F.conv2d(groups=C, stride=2)."""
    n, c, ih, iw = x.shape
    pad_h = _calc_same_pad(ih, KSIZE, STRIDE)
    pad_w = _calc_same_pad(iw, KSIZE, STRIDE)
    x_pad = jnp.pad(
        x,
        ((0, 0), (0, 0),
         (pad_h // 2, pad_h - pad_h // 2),
         (pad_w // 2, pad_w - pad_w // 2)),
    )
    k1 = jnp.asarray([1.0, 3.0, 3.0, 1.0], dtype=jnp.float32)
    w2 = k1[None, :] * k1[:, None]
    w2 = w2 / jnp.sum(w2)
    w = jnp.broadcast_to(w2[None, None, :, :], (c, 1, KSIZE, KSIZE))
    return lax.conv_general_dilated(
        x_pad, w,
        window_strides=(STRIDE, STRIDE),
        padding="VALID",
        feature_group_count=c,
        dimension_numbers=("NCHW", "OIHW", "NCHW"),
    )


if __name__ == "__main__":
    key = jax.random.PRNGKey(0)

    # Test 1: module-sized input (single grid step).
    x = jax.random.normal(key, (2, 4, 16, 16), dtype=jnp.float32)  # NCHW
    out = jax.block_until_ready(blur_block(x))
    ref = jax.block_until_ready(blur_block_reference(x))
    assert out.shape == (2, 4, 8, 8), out.shape
    assert jnp.allclose(out, ref, rtol=1e-4, atol=1e-4), (
        float(jnp.max(jnp.abs(out - ref))))

    # Test 2: force multiple row blocks to exercise the halo BlockSpec path.
    key2 = jax.random.PRNGKey(1)
    x2 = jax.random.normal(key2, (1, 4, 32, 32), dtype=jnp.float32)
    out2 = jax.block_until_ready(blur_block(x2, row_block_cap=4))
    ref2 = jax.block_until_ready(blur_block_reference(x2))
    assert out2.shape == (1, 4, 16, 16), out2.shape
    assert jnp.allclose(out2, ref2, rtol=1e-4, atol=1e-4), (
        float(jnp.max(jnp.abs(out2 - ref2))))

    # Test 3: odd spatial size (pad = 3 path) and larger channel count.
    key3 = jax.random.PRNGKey(2)
    x3 = jax.random.normal(key3, (1, 8, 15, 17), dtype=jnp.float32)
    out3 = jax.block_until_ready(blur_block(x3))
    ref3 = jax.block_until_ready(blur_block_reference(x3))
    assert out3.shape == ref3.shape, (out3.shape, ref3.shape)
    assert jnp.allclose(out3, ref3, rtol=1e-4, atol=1e-4), (
        float(jnp.max(jnp.abs(out3 - ref3))))

    print("KERNEL_OK")
</pallas_src>

<mosaic_0001>
module attributes {stable_mosaic.version = 11 : i64} {
  func.func @_blur_kernel(%arg0: i32, %arg1: i32, %arg2: memref<2x2x8x9x8xf32, #tpu.memory_space<vmem>>, %arg3: memref<2x2x1x9x8xf32, #tpu.memory_space<vmem>>, %arg4: memref<8x8x8xf32, #tpu.memory_space<vmem>>) attributes {dimension_semantics = [#tpu.dimension_semantics<parallel>, #tpu.dimension_semantics<parallel>], iteration_bounds = array<i64: 1, 1>, scalar_prefetch = 0 : i64, scratch_operands = 0 : i64, tpu.core_type = #tpu.core_type<tc>, window_params = [{transform_indices = @transform_0, window_bounds = array<i64: 2, 2, 8, 9, 8>}, {transform_indices = @transform_1, window_bounds = array<i64: 2, 2, 1, 9, 8>}, {transform_indices = @transform_2, window_bounds = array<i64: 8, 8, 8>}]} {
    %c0 = arith.constant 0 : index
    %c0_0 = arith.constant 0 : index
    %c0_1 = arith.constant 0 : index
    %c0_2 = arith.constant 0 : index
    %c0_3 = arith.constant 0 : index
    %0 = vector.load %arg2[%c0, %c0_0, %c0_1, %c0_2, %c0_3] : memref<2x2x8x9x8xf32, #tpu.memory_space<vmem>>, vector<1x1x8x9x8xf32>
    %1 = vector.shape_cast %0 : vector<1x1x8x9x8xf32> to vector<8x9x8xf32>
    %c0_4 = arith.constant 0 : index
    %c1 = arith.constant 1 : index
    %c0_5 = arith.constant 0 : index
    %c0_6 = arith.constant 0 : index
    %c0_7 = arith.constant 0 : index
    %2 = vector.load %arg2[%c0_4, %c1, %c0_5, %c0_6, %c0_7] : memref<2x2x8x9x8xf32, #tpu.memory_space<vmem>>, vector<1x1x8x9x8xf32>
    %3 = vector.shape_cast %2 : vector<1x1x8x9x8xf32> to vector<8x9x8xf32>
    %4 = vector.extract_strided_slice %1 {offsets = [0, 0, 0], sizes = [8, 8, 8], strides = [1, 1, 1]} : vector<8x9x8xf32> to vector<8x8x8xf32>
    %5 = vector.extract_strided_slice %3 {offsets = [0, 1, 0], sizes = [8, 8, 8], strides = [1, 1, 1]} : vector<8x9x8xf32> to vector<8x8x8xf32>
    %6 = arith.addf %4, %5 : vector<8x8x8xf32>
    %7 = vector.extract_strided_slice %3 {offsets = [0, 0, 0], sizes = [8, 8, 8], strides = [1, 1, 1]} : vector<8x9x8xf32> to vector<8x8x8xf32>
    %8 = vector.extract_strided_slice %1 {offsets = [0, 1, 0], sizes = [8, 8, 8], strides = [1, 1, 1]} : vector<8x9x8xf32> to vector<8x8x8xf32>
    %9 = arith.addf %7, %8 : vector<8x8x8xf32>
    %cst = arith.constant 3.000000e+00 : f32
    %10 = vector.broadcast %cst : f32 to vector<8x8x8xf32>
    %11 = arith.mulf %10, %9 : vector<8x8x8xf32>
    %12 = arith.addf %6, %11 : vector<8x8x8xf32>
    %c1_8 = arith.constant 1 : index
    %c0_9 = arith.constant 0 : index
    %c0_10 = arith.constant 0 : index
    %c0_11 = arith.constant 0 : index
    %c0_12 = arith.constant 0 : index
    %13 = vector.load %arg2[%c1_8, %c0_9, %c0_10, %c0_11, %c0_12] : memref<2x2x8x9x8xf32, #tpu.memory_space<vmem>>, vector<1x1x8x9x8xf32>
    %14 = vector.shape_cast %13 : vector<1x1x8x9x8xf32> to vector<8x9x8xf32>
    %c1_13 = arith.constant 1 : index
    %c1_14 = arith.constant 1 : index
    %c0_15 = arith.constant 0 : index
    %c0_16 = arith.constant 0 : index
    %c0_17 = arith.constant 0 : index
    %15 = vector.load %arg2[%c1_13, %c1_14, %c0_15, %c0_16, %c0_17] : memref<2x2x8x9x8xf32, #tpu.memory_space<vmem>>, vector<1x1x8x9x8xf32>
    %16 = vector.shape_cast %15 : vector<1x1x8x9x8xf32> to vector<8x9x8xf32>
    %17 = vector.extract_strided_slice %14 {offsets = [0, 0, 0], sizes = [8, 8, 8], strides = [1, 1, 1]} : vector<8x9x8xf32> to vector<8x8x8xf32>
    %18 = vector.extract_strided_slice %16 {offsets = [0, 1, 0], sizes = [8, 8, 8], strides = [1, 1, 1]} : vector<8x9x8xf32> to vector<8x8x8xf32>
    %19 = arith.addf %17, %18 : vector<8x8x8xf32>
    %20 = vector.extract_strided_slice %16 {offsets = [0, 0, 0], sizes = [8, 8, 8], strides = [1, 1, 1]} : vector<8x9x8xf32> to vector<8x8x8xf32>
    %21 = vector.extract_strided_slice %14 {offsets = [0, 1, 0], sizes = [8, 8, 8], strides = [1, 1, 1]} : vector<8x9x8xf32> to vector<8x8x8xf32>
    %22 = arith.addf %20, %21 : vector<8x8x8xf32>
    %cst_18 = arith.constant 3.000000e+00 : f32
    %23 = vector.broadcast %cst_18 : f32 to vector<8x8x8xf32>
    %24 = arith.mulf %23, %22 : vector<8x8x8xf32>
    %25 = arith.addf %19, %24 : vector<8x8x8xf32>
    %c0_19 = arith.constant 0 : index
    %c0_20 = arith.constant 0 : index
    %c0_21 = arith.constant 0 : index
    %c0_22 = arith.constant 0 : index
    %c0_23 = arith.constant 0 : index
    %26 = vector.load %arg3[%c0_19, %c0_20, %c0_21, %c0_22, %c0_23] : memref<2x2x1x9x8xf32, #tpu.memory_space<vmem>>, vector<1x1x1x9x8xf32>
    %27 = vector.shape_cast %26 : vector<1x1x1x9x8xf32> to vector<1x9x8xf32>
    %c0_24 = arith.constant 0 : index
    %c1_25 = arith.constant 1 : index
    %c0_26 = arith.constant 0 : index
    %c0_27 = arith.constant 0 : index
    %c0_28 = arith.constant 0 : index
    %28 = vector.load %arg3[%c0_24, %c1_25, %c0_26, %c0_27, %c0_28] : memref<2x2x1x9x8xf32, #tpu.memory_space<vmem>>, vector<1x1x1x9x8xf32>
    %29 = vector.shape_cast %28 : vector<1x1x1x9x8xf32> to vector<1x9x8xf32>
    %30 = vector.extract_strided_slice %27 {offsets = [0, 0, 0], sizes = [1, 8, 8], strides = [1, 1, 1]} : vector<1x9x8xf32> to vector<1x8x8xf32>
    %31 = vector.extract_strided_slice %29 {offsets = [0, 1, 0], sizes = [1, 8, 8], strides = [1, 1, 1]} : vector<1x9x8xf32> to vector<1x8x8xf32>
    %32 = arith.addf %30, %31 : vector<1x8x8xf32>
    %33 = vector.extract_strided_slice %29 {offsets = [0, 0, 0], sizes = [1, 8, 8], strides = [1, 1, 1]} : vector<1x9x8xf32> to vector<1x8x8xf32>
    %34 = vector.extract_strided_slice %27 {offsets = [0, 1, 0], sizes = [1, 8, 8], strides = [1, 1, 1]} : vector<1x9x8xf32> to vector<1x8x8xf32>
    %35 = arith.addf %33, %34 : vector<1x8x8xf32>
    %cst_29 = arith.constant 3.000000e+00 : f32
    %36 = vector.broadcast %cst_29 : f32 to vector<1x8x8xf32>
    %37 = arith.mulf %36, %35 : vector<1x8x8xf32>
    %38 = arith.addf %32, %37 : vector<1x8x8xf32>
    %c1_30 = arith.constant 1 : index
    %c0_31 = arith.constant 0 : index
    %c0_32 = arith.constant 0 : index
    %c0_33 = arith.constant 0 : index
    %c0_34 = arith.constant 0 : index
    %39 = vector.load %arg3[%c1_30, %c0_31, %c0_32, %c0_33, %c0_34] : memref<2x2x1x9x8xf32, #tpu.memory_space<vmem>>, vector<1x1x1x9x8xf32>
    %40 = vector.shape_cast %39 : vector<1x1x1x9x8xf32> to vector<1x9x8xf32>
    %c1_35 = arith.constant 1 : index
    %c1_36 = arith.constant 1 : index
    %c0_37 = arith.constant 0 : index
    %c0_38 = arith.constant 0 : index
    %c0_39 = arith.constant 0 : index
    %41 = vector.load %arg3[%c1_35, %c1_36, %c0_37, %c0_38, %c0_39] : memref<2x2x1x9x8xf32, #tpu.memory_space<vmem>>, vector<1x1x1x9x8xf32>
    %42 = vector.shape_cast %41 : vector<1x1x1x9x8xf32> to vector<1x9x8xf32>
    %43 = vector.extract_strided_slice %40 {offsets = [0, 0, 0], sizes = [1, 8, 8], strides = [1, 1, 1]} : vector<1x9x8xf32> to vector<1x8x8xf32>
    %44 = vector.extract_strided_slice %42 {offsets = [0, 1, 0], sizes = [1, 8, 8], strides = [1, 1, 1]} : vector<1x9x8xf32> to vector<1x8x8xf32>
    %45 = arith.addf %43, %44 : vector<1x8x8xf32>
    %46 = vector.extract_strided_slice %42 {offsets = [0, 0, 0], sizes = [1, 8, 8], strides = [1, 1, 1]} : vector<1x9x8xf32> to vector<1x8x8xf32>
    %47 = vector.extract_strided_slice %40 {offsets = [0, 1, 0], sizes = [1, 8, 8], strides = [1, 1, 1]} : vector<1x9x8xf32> to vector<1x8x8xf32>
    %48 = arith.addf %46, %47 : vector<1x8x8xf32>
    %cst_40 = arith.constant 3.000000e+00 : f32
    %49 = vector.broadcast %cst_40 : f32 to vector<1x8x8xf32>
    %50 = arith.mulf %49, %48 : vector<1x8x8xf32>
    %51 = arith.addf %45, %50 : vector<1x8x8xf32>
    %52 = vector.extract_strided_slice %12 {offsets = [0, 0, 0], sizes = [7, 8, 8], strides = [1, 1, 1]} : vector<8x8x8xf32> to vector<7x8x8xf32>
    %53 = vector.extract_strided_slice %25 {offsets = [1, 0, 0], sizes = [7, 8, 8], strides = [1, 1, 1]} : vector<8x8x8xf32> to vector<7x8x8xf32>
    %54 = arith.addf %52, %53 : vector<7x8x8xf32>
    %55 = vector.extract_strided_slice %25 {offsets = [0, 0, 0], sizes = [7, 8, 8], strides = [1, 1, 1]} : vector<8x8x8xf32> to vector<7x8x8xf32>
    %56 = vector.extract_strided_slice %12 {offsets = [1, 0, 0], sizes = [7, 8, 8], strides = [1, 1, 1]} : vector<8x8x8xf32> to vector<7x8x8xf32>
    %57 = arith.addf %55, %56 : vector<7x8x8xf32>
    %cst_41 = arith.constant 3.000000e+00 : f32
    %58 = vector.broadcast %cst_41 : f32 to vector<7x8x8xf32>
    %59 = arith.mulf %58, %57 : vector<7x8x8xf32>
    %60 = arith.addf %54, %59 : vector<7x8x8xf32>
    %cst_42 = arith.constant 1.562500e-02 : f32
    %61 = vector.broadcast %cst_42 : f32 to vector<7x8x8xf32>
    %62 = arith.mulf %60, %61 : vector<7x8x8xf32>
    %c0_43 = arith.constant 0 : index
    %c0_44 = arith.constant 0 : index
    %c0_45 = arith.constant 0 : index
    %63 = vector.load %arg4[%c0_43, %c0_44, %c0_45] : memref<8x8x8xf32, #tpu.memory_space<vmem>>, vector<7x8x8xf32>
    tpu.vector_store %arg4[%c0_43, %c0_44, %c0_45], %62 {strides = array<i32>} : memref<8x8x8xf32, #tpu.memory_space<vmem>>, vector<7x8x8xf32>,
    %64 = vector.extract_strided_slice %12 {offsets = [7, 0, 0], sizes = [1, 8, 8], strides = [1, 1, 1]} : vector<8x8x8xf32> to vector<1x8x8xf32>
    %65 = arith.addf %64, %51 : vector<1x8x8xf32>
    %66 = vector.extract_strided_slice %25 {offsets = [7, 0, 0], sizes = [1, 8, 8], strides = [1, 1, 1]} : vector<8x8x8xf32> to vector<1x8x8xf32>
    %67 = arith.addf %66, %38 : vector<1x8x8xf32>
    %cst_46 = arith.constant 3.000000e+00 : f32
    %68 = vector.broadcast %cst_46 : f32 to vector<1x8x8xf32>
    %69 = arith.mulf %68, %67 : vector<1x8x8xf32>
    %70 = arith.addf %65, %69 : vector<1x8x8xf32>
    %cst_47 = arith.constant 1.562500e-02 : f32
    %71 = vector.broadcast %cst_47 : f32 to vector<1x8x8xf32>
    %72 = arith.mulf %70, %71 : vector<1x8x8xf32>
    %c7 = arith.constant 7 : index
    %c0_48 = arith.constant 0 : index
    %c0_49 = arith.constant 0 : index
    %73 = vector.load %arg4[%c7, %c0_48, %c0_49] : memref<8x8x8xf32, #tpu.memory_space<vmem>>, vector<1x8x8xf32>
    tpu.vector_store %arg4[%c7, %c0_48, %c0_49], %72 {strides = array<i32>} : memref<8x8x8xf32, #tpu.memory_space<vmem>>, vector<1x8x8xf32>,
    return
  }
  func.func @transform_0(%arg0: i32, %arg1: i32) -> (i32, i32, i32, i32, i32) {
    %c0_i32 = arith.constant 0 : i32
    %c0_i32_0 = arith.constant 0 : i32
    %c0_i32_1 = arith.constant 0 : i32
    %c0_i32_2 = arith.constant 0 : i32
    return %c0_i32, %c0_i32_0, %arg1, %c0_i32_1, %arg0 : i32, i32, i32, i32, i32
  }
  func.func @transform_1(%arg0: i32, %arg1: i32) -> (i32, i32, i32, i32, i32) {
    %c1_i32 = arith.constant 1 : i32
    %0 = arith.addi %arg1, %c1_i32 : i32
    %c8_i32 = arith.constant 8 : i32
    %1 = arith.muli %0, %c8_i32 : i32
    %c0_i32 = arith.constant 0 : i32
    %c0_i32_0 = arith.constant 0 : i32
    %c0_i32_1 = arith.constant 0 : i32
    %c0_i32_2 = arith.constant 0 : i32
    return %c0_i32, %c0_i32_0, %1, %c0_i32_1, %arg0 : i32, i32, i32, i32, i32
  }
  func.func @transform_2(%arg0: i32, %arg1: i32) -> (i32, i32, i32) {
    %c0_i32 = arith.constant 0 : i32
    %c0_i32_0 = arith.constant 0 : i32
    return %arg1, %c0_i32, %arg0 : i32, i32, i32
  }
}

</mosaic_0001>

<llo_original>
// kernel: tpu_custom_call.1
$region0: #{tpu_custom_call.1}
  #allocation0 [shape = 'u32[]', space=smem, size = 0x4, offset = 0x4, fixed_abs, tag = 'smem constant byte address 0x4 - core index']
  #allocation1 [shape = 'u32[72,128]{1,0:T(1,128)}', space=vmem, size = 0x9000, scoped, tag = 'internal scratch']
  %s0 = inlined_call_operand.vmem [shape: f32[2,2,9,9,8], index: 0, kind: input, shape index: {}]
  %s1 = inlined_call_operand.vmem [shape: f32[2,2,9,9,8], index: 1, kind: input, shape index: {}]
  %s2 = inlined_call_operand.hbm [shape: f32[8,8,8], index: 2, kind: output, shape index: {}]
  %s3 = sld [smem:[#allocation0]]
  $region94: #{tpu_custom_call.1} parent=0
    _
  %s5 = ssub.s32 1, %s3
  %s6 = scalar_select 0, %s5, %s3
  $region1: #{tpu_custom_call.1} parent=0
    #allocation2 [shape = 'u8[262144]{0}', space=vmem, size = 0x40000, scoped, tag = 'input window, operand 0, single buffered']
    #allocation3 [shape = 'u8[32768]{0}', space=vmem, size = 0x8000, scoped, tag = 'input window, operand 1, single buffered']
    #allocation4 [shape = 'u8[32768]{0}', space=vmem, size = 0x8000, scoped, tag = 'output window, operand 0, single buffered']
    #allocation5 [shape = 's32[1]{0}', space=sflag, size = 0x4, scoped, tag = 'scoped memory for tpu_custom_call.1']
    %7 = vsyncpa [#allocation5], 0
    // Predicated region
    $region2: #{tpu_custom_call.1} parent=1 // pred_check
      _
    $region3: #{tpu_custom_call.1} parent=1 // pred_check_branch
      %9 = sbr.rel (0) target = $region5
    $region4: #{tpu_custom_call.1} parent=1 // pred_region
      // Predicated region
      $region6: #{tpu_custom_call.1} parent=4 // pred_check
        _
      $region7: #{tpu_custom_call.1} parent=4 // pred_check_branch
        %11 = sbr.rel (0) target = $region9
      $region8: #{tpu_custom_call.1} parent=4 // pred_region
        // Predicated region
        $region10: #{tpu_custom_call.1} parent=8 // pred_check
          _
        $region11: #{tpu_custom_call.1} parent=8 // pred_check_branch
          %13 = sbr.rel (0) target = $region13
        $region12: #{tpu_custom_call.1} parent=8 // pred_region
          // Predicated region
          $region25: #{tpu_custom_call.1} parent=12 // pred_check
            _
          $region26: #{tpu_custom_call.1} parent=12 // pred_check_branch
            %155 = sbr.rel (0) target = $region28
          $region27: #{tpu_custom_call.1} parent=12 // pred_region
            loop: start=0, step=1, limit=1
            $region29: #{tpu_custom_call.1} parent=27 // loop_pre_header
              _
            $region30: #{tpu_custom_call.1} parent=27 // loop_header
              %s157 = sphi 0, %s161
              %p158 = scmp.ge.s32.totalorder %s157, 1
              %s162 = sphi %s0, %s0
              %s163 = sphi [#allocation2], [#allocation2]
            $region31: #{tpu_custom_call.1} parent=27 // loop_header_branch
              %160 = sbr.rel (%p158) target = $region35
            $region32: #{tpu_custom_call.1} parent=27 // loop_body
              %v164 = vld [vmem:[%s162] sm:$0xff]
              %165 = vst [vmem:[%s163] sm:$0xff] %v164
              %v166 = vld [vmem:[%s162 + $0x8] sm:$0xff]
              %167 = vst [vmem:[%s163 + $0x8] sm:$0xff] %v166
              %v168 = vld [vmem:[%s162 + $0x10] sm:$0xff]
              %169 = vst [vmem:[%s163 + $0x10] sm:$0xff] %v168
              %v170 = vld [vmem:[%s162 + $0x18] sm:$0xff]
              %171 = vst [vmem:[%s163 + $0x18] sm:$0xff] %v170
              %v172 = vld [vmem:[%s162 + $0x20] sm:$0xff]
              %173 = vst [vmem:[%s163 + $0x20] sm:$0xff] %v172
              %v174 = vld [vmem:[%s162 + $0x28] sm:$0xff]
              %175 = vst [vmem:[%s163 + $0x28] sm:$0xff] %v174
              %v176 = vld [vmem:[%s162 + $0x30] sm:$0xff]
              %177 = vst [vmem:[%s163 + $0x30] sm:$0xff] %v176
              %v178 = vld [vmem:[%s162 + $0x38] sm:$0xff]
              %179 = vst [vmem:[%s163 + $0x38] sm:$0xff] %v178
              %v180 = vld [vmem:[%s162 + $0x40] sm:$0xff]
              %181 = vst [vmem:[%s163 + $0x40] sm:$0xff] %v180
              %v182 = vld [vmem:[%s162 + $0x48] sm:$0xff]
              %183 = vst [vmem:[%s163 + $0x48] sm:$0xff] %v182
              %v184 = vld [vmem:[%s162 + $0x50] sm:$0xff]
              %185 = vst [vmem:[%s163 + $0x50] sm:$0xff] %v184
              %v186 = vld [vmem:[%s162 + $0x58] sm:$0xff]
              %187 = vst [vmem:[%s163 + $0x58] sm:$0xff] %v186
              %v188 = vld [vmem:[%s162 + $0x60] sm:$0xff]
              %189 = vst [vmem:[%s163 + $0x60] sm:$0xff] %v188
              %v190 = vld [vmem:[%s162 + $0x68] sm:$0xff]
              %191 = vst [vmem:[%s163 + $0x68] sm:$0xff] %v190
              %v192 = vld [vmem:[%s162 + $0x70] sm:$0xff]
              %193 = vst [vmem:[%s163 + $0x70] sm:$0xff] %v192
              %v194 = vld [vmem:[%s162 + $0x78] sm:$0xff]
              %195 = vst [vmem:[%s163 + $0x78] sm:$0xff] %v194
              %v196 = vld [vmem:[%s162 + $0x90] sm:$0xff]
              %197 = vst [vmem:[%s163 + $0x80] sm:$0xff] %v196
              %v198 = vld [vmem:[%s162 + $0x98] sm:$0xff]
              %199 = vst [vmem:[%s163 + $0x88] sm:$0xff] %v198
              %v200 = vld [vmem:[%s162 + $0xa0] sm:$0xff]
              %201 = vst [vmem:[%s163 + $0x90] sm:$0xff] %v200
              %v202 = vld [vmem:[%s162 + $0xa8] sm:$0xff]
              %203 = vst [vmem:[%s163 + $0x98] sm:$0xff] %v202
              %v204 = vld [vmem:[%s162 + $0xb0] sm:$0xff]
              %205 = vst [vmem:[%s163 + $0xa0] sm:$0xff] %v204
              %v206 = vld [vmem:[%s162 + $0xb8] sm:$0xff]
              %207 = vst [vmem:[%s163 + $0xa8] sm:$0xff] %v206
              %v208 = vld [vmem:[%s162 + $0xc0] sm:$0xff]
              %209 = vst [vmem:[%s163 + $0xb0] sm:$0xff] %v208
              %v210 = vld [vmem:[%s162 + $0xc8] sm:$0xff]
              %211 = vst [vmem:[%s163 + $0xb8] sm:$0xff] %v210
              %v212 = vld [vmem:[%s162 + $0xd0] sm:$0xff]
              %213 = vst [vmem:[%s163 + $0xc0] sm:$0xff] %v212
              %v214 = vld [vmem:[%s162 + $0xd8] sm:$0xff]
              %215 = vst [vmem:[%s163 + $0xc8] sm:$0xff] %v214
              %v216 = vld [vmem:[%s162 + $0xe0] sm:$0xff]
              %217 = vst [vmem:[%s163 + $0xd0] sm:$0xff] %v216
              %v218 = vld [vmem:[%s162 + $0xe8] sm:$0xff]
              %219 = vst [vmem:[%s163 + $0xd8] sm:$0xff] %v218
              %v220 = vld [vmem:[%s162 + $0xf0] sm:$0xff]
              %221 = vst [vmem:[%s163 + $0xe0] sm:$0xff] %v220
              %v222 = vld [vmem:[%s162 + $0xf8] sm:$0xff]
              %223 = vst [vmem:[%s163 + $0xe8] sm:$0xff] %v222
              %v224 = vld [vmem:[%s162 + $0x100] sm:$0xff]
              %225 = vst [vmem:[%s163 + $0xf0] sm:$0xff] %v224
              %v226 = vld [vmem:[%s162 + $0x108] sm:$0xff]
              %227 = vst [vmem:[%s163 + $0xf8] sm:$0xff] %v226
              %v228 = vld [vmem:[%s162 + $0x120] sm:$0xff]
              %229 = vst [vmem:[%s163 + $0x100] sm:$0xff] %v228
              %v230 = vld [vmem:[%s162 + $0x128] sm:$0xff]
              %231 = vst [vmem:[%s163 + $0x108] sm:$0xff] %v230
              %v232 = vld [vmem:[%s162 + $0x130] sm:$0xff]
              %233 = vst [vmem:[%s163 + $0x110] sm:$0xff] %v232
              %v234 = vld [vmem:[%s162 + $0x138] sm:$0xff]
              %235 = vst [vmem:[%s163 + $0x118] sm:$0xff] %v234
              %v236 = vld [vmem:[%s162 + $0x140] sm:$0xff]
              %237 = vst [vmem:[%s163 + $0x120] sm:$0xff] %v236
              %v238 = vld [vmem:[%s162 + $0x148] sm:$0xff]
              %239 = vst [vmem:[%s163 + $0x128] sm:$0xff] %v238
              %v240 = vld [vmem:[%s162 + $0x150] sm:$0xff]
              %241 = vst [vmem:[%s163 + $0x130] sm:$0xff] %v240
              %v242 = vld [vmem:[%s162 + $0x158] sm:$0xff]
              %243 = vst [vmem:[%s163 + $0x138] sm:$0xff] %v242
              %v244 = vld [vmem:[%s162 + $0x160] sm:$0xff]
              %245 = vst [vmem:[%s163 + $0x140] sm:$0xff] %v244
              %v246 = vld [vmem:[%s162 + $0x168] sm:$0xff]
              %247 = vst [vmem:[%s163 + $0x148] sm:$0xff] %v246
              %v248 = vld [vmem:[%s162 + $0x170] sm:$0xff]
              %249 = vst [vmem:[%s163 + $0x150] sm:$0xff] %v248
              %v250 = vld [vmem:[%s162 + $0x178] sm:$0xff]
              %251 = vst [vmem:[%s163 + $0x158] sm:$0xff] %v250
              %v252 = vld [vmem:[%s162 + $0x180] sm:$0xff]
              %253 = vst [vmem:[%s163 + $0x160] sm:$0xff] %v252
              %v254 = vld [vmem:[%s162 + $0x188] sm:$0xff]
              %255 = vst [vmem:[%s163 + $0x168] sm:$0xff] %v254
              %v256 = vld [vmem:[%s162 + $0x190] sm:$0xff]
              %257 = vst [vmem:[%s163 + $0x170] sm:$0xff] %v256
              %v258 = vld [vmem:[%s162 + $0x198] sm:$0xff]
              %259 = vst [vmem:[%s163 + $0x178] sm:$0xff] %v258
              %v260 = vld [vmem:[%s162 + $0x1b0] sm:$0xff]
              %261 = vst [vmem:[%s163 + $0x180] sm:$0xff] %v260
              %v262 = vld [vmem:[%s162 + $0x1b8] sm:$0xff]
              %263 = vst [vmem:[%s163 + $0x188] sm:$0xff] %v262
              %v264 = vld [vmem:[%s162 + $0x1c0] sm:$0xff]
              %265 = vst [vmem:[%s163 + $0x190] sm:$0xff] %v264
              %v266 = vld [vmem:[%s162 + $0x1c8] sm:$0xff]
              %267 = vst [vmem:[%s163 + $0x198] sm:$0xff] %v266
              %v268 = vld [vmem:[%s162 + $0x1d0] sm:$0xff]
              %269 = vst [vmem:[%s163 + $0x1a0] sm:$0xff] %v268
              %v270 = vld [vmem:[%s162 + $0x1d8] sm:$0xff]
              %271 = vst [vmem:[%s163 + $0x1a8] sm:$0xff] %v270
              %v272 = vld [vmem:[%s162 + $0x1e0] sm:$0xff]
              %273 = vst [vmem:[%s163 + $0x1b0] sm:$0xff] %v272
              %v274 = vld [vmem:[%s162 + $0x1e8] sm:$0xff]
              %275 = vst [vmem:[%s163 + $0x1b8] sm:$0xff] %v274
              %v276 = vld [vmem:[%s162 + $0x1f0] sm:$0xff]
              %277 = vst [vmem:[%s163 + $0x1c0] sm:$0xff] %v276
              %v278 = vld [vmem:[%s162 + $0x1f8] sm:$0xff]
              %279 = vst [vmem:[%s163 + $0x1c8] sm:$0xff] %v278
              %v280 = vld [vmem:[%s162 + $0x200] sm:$0xff]
              %281 = vst [vmem:[%s163 + $0x1d0] sm:$0xff] %v280
              %v282 = vld [vmem:[%s162 + $0x208] sm:$0xff]
              %283 = vst [vmem:[%s163 + $0x1d8] sm:$0xff] %v282
              %v284 = vld [vmem:[%s162 + $0x210] sm:$0xff]
              %285 = vst [vmem:[%s163 + $0x1e0] sm:$0xff] %v284
              %v286 = vld [vmem:[%s162 + $0x218] sm:$0xff]
              %287 = vst [vmem:[%s163 + $0x1e8] sm:$0xff] %v286
              %v288 = vld [vmem:[%s162 + $0x220] sm:$0xff]
              %289 = vst [vmem:[%s163 + $0x1f0] sm:$0xff] %v288
              %v290 = vld [vmem:[%s162 + $0x228] sm:$0xff]
              %291 = vst [vmem:[%s163 + $0x1f8] sm:$0xff] %v290
            $region33: #{tpu_custom_call.1} parent=27 // loop_footer
              %s161 = sadd.s32 1, %s157
            $region34: #{tpu_custom_call.1} parent=27 // loop_footer_branch
              %156 = sbr.rel target = $region30
            $region35: #{tpu_custom_call.1} parent=27 // loop_exit
              _
          $region28: #{tpu_custom_call.1} parent=12 // pred_fallthru
            _
          // Predicated region
          $region36: #{tpu_custom_call.1} parent=12 // pred_check
            _
          $region37: #{tpu_custom_call.1} parent=12 // pred_check_branch
            %293 = sbr.rel target = $region39
          $region38: #{tpu_custom_call.1} parent=12 // pred_region
            _
          $region39: #{tpu_custom_call.1} parent=12 // pred_fallthru
            _
        $region13: #{tpu_custom_call.1} parent=8 // pred_fallthru
          _
        // Predicated region
        $region14: #{tpu_custom_call.1} parent=8 // pred_check
          _
        $region15: #{tpu_custom_call.1} parent=8 // pred_check_branch
          %15 = sbr.rel target = $region17
        $region16: #{tpu_custom_call.1} parent=8 // pred_region
          %s17 = ssub.s32 256, 1
          loop: start=0, step=1, limit=1
          $region18: #{tpu_custom_call.1} parent=16 // loop_pre_header
            _
          $region19: #{tpu_custom_call.1} parent=16 // loop_header
            %s19 = sphi 0, %s23
            %p20 = scmp.ge.s32.totalorder %s19, 1
            %s24 = sphi %s0, %s0
            %s25 = sphi [#allocation2], [#allocation2]
          $region20: #{tpu_custom_call.1} parent=16 // loop_header_branch
            %22 = sbr.rel (%p20) target = $region24
          $region21: #{tpu_custom_call.1} parent=16 // loop_body
            %v26 = vld [vmem:[%s24] sm:%s17]
            %27 = vst [vmem:[%s25] sm:%s17] %v26
            %v28 = vld [vmem:[%s24 + $0x8] sm:%s17]
            %29 = vst [vmem:[%s25 + $0x8] sm:%s17] %v28
            %v30 = vld [vmem:[%s24 + $0x10] sm:%s17]
            %31 = vst [vmem:[%s25 + $0x10] sm:%s17] %v30
            %v32 = vld [vmem:[%s24 + $0x18] sm:%s17]
            %33 = vst [vmem:[%s25 + $0x18] sm:%s17] %v32
            %v34 = vld [vmem:[%s24 + $0x20] sm:%s17]
            %35 = vst [vmem:[%s25 + $0x20] sm:%s17] %v34
            %v36 = vld [vmem:[%s24 + $0x28] sm:%s17]
            %37 = vst [vmem:[%s25 + $0x28] sm:%s17] %v36
            %v38 = vld [vmem:[%s24 + $0x30] sm:%s17]
            %39 = vst [vmem:[%s25 + $0x30] sm:%s17] %v38
            %v40 = vld [vmem:[%s24 + $0x38] sm:%s17]
            %41 = vst [vmem:[%s25 + $0x38] sm:%s17] %v40
            %v42 = vld [vmem:[%s24 + $0x40] sm:%s17]
            %43 = vst [vmem:[%s25 + $0x40] sm:%s17] %v42
            %v44 = vld [vmem:[%s24 + $0x48] sm:%s17]
            %45 = vst [vmem:[%s25 + $0x48] sm:%s17] %v44
            %v46 = vld [vmem:[%s24 + $0x50] sm:%s17]
            %47 = vst [vmem:[%s25 + $0x50] sm:%s17] %v46
            %v48 = vld [vmem:[%s24 + $0x58] sm:%s17]
            %49 = vst [vmem:[%s25 + $0x58] sm:%s17] %v48
            %v50 = vld [vmem:[%s24 + $0x60] sm:%s17]
            %51 = vst [vmem:[%s25 + $0x60] sm:%s17] %v50
            %v52 = vld [vmem:[%s24 + $0x68] sm:%s17]
            %53 = vst [vmem:[%s25 + $0x68] sm:%s17] %v52
            %v54 = vld [vmem:[%s24 + $0x70] sm:%s17]
            %55 = vst [vmem:[%s25 + $0x70] sm:%s17] %v54
            %v56 = vld [vmem:[%s24 + $0x78] sm:%s17]
            %57 = vst [vmem:[%s25 + $0x78] sm:%s17] %v56
            %v58 = vld [vmem:[%s24 + $0x90] sm:%s17]
            %59 = vst [vmem:[%s25 + $0x80] sm:%s17] %v58
            %v60 = vld [vmem:[%s24 + $0x98] sm:%s17]
            %61 = vst [vmem:[%s25 + $0x88] sm:%s17] %v60
            %v62 = vld [vmem:[%s24 + $0xa0] sm:%s17]
            %63 = vst [vmem:[%s25 + $0x90] sm:%s17] %v62
            %v64 = vld [vmem:[%s24 + $0xa8] sm:%s17]
            %65 = vst [vmem:[%s25 + $0x98] sm:%s17] %v64
            %v66 = vld [vmem:[%s24 + $0xb0] sm:%s17]
            %67 = vst [vmem:[%s25 + $0xa0] sm:%s17] %v66
            %v68 = vld [vmem:[%s24 + $0xb8] sm:%s17]
            %69 = vst [vmem:[%s25 + $0xa8] sm:%s17] %v68
            %v70 = vld [vmem:[%s24 + $0xc0] sm:%s17]
            %71 = vst [vmem:[%s25 + $0xb0] sm:%s17] %v70
            %v72 = vld [vmem:[%s24 + $0xc8] sm:%s17]
            %73 = vst [vmem:[%s25 + $0xb8] sm:%s17] %v72
            %v74 = vld [vmem:[%s24 + $0xd0] sm:%s17]
            %75 = vst [vmem:[%s25 + $0xc0] sm:%s17] %v74
            %v76 = vld [vmem:[%s24 + $0xd8] sm:%s17]
            %77 = vst [vmem:[%s25 + $0xc8] sm:%s17] %v76
            %v78 = vld [vmem:[%s24 + $0xe0] sm:%s17]
            %79 = vst [vmem:[%s25 + $0xd0] sm:%s17] %v78
            %v80 = vld [vmem:[%s24 + $0xe8] sm:%s17]
            %81 = vst [vmem:[%s25 + $0xd8] sm:%s17] %v80
            %v82 = vld [vmem:[%s24 + $0xf0] sm:%s17]
            %83 = vst [vmem:[%s25 + $0xe0] sm:%s17] %v82
            %v84 = vld [vmem:[%s24 + $0xf8] sm:%s17]
            %85 = vst [vmem:[%s25 + $0xe8] sm:%s17] %v84
            %v86 = vld [vmem:[%s24 + $0x100] sm:%s17]
            %87 = vst [vmem:[%s25 + $0xf0] sm:%s17] %v86
            %v88 = vld [vmem:[%s24 + $0x108] sm:%s17]
            %89 = vst [vmem:[%s25 + $0xf8] sm:%s17] %v88
            %v90 = vld [vmem:[%s24 + $0x120] sm:%s17]
            %91 = vst [vmem:[%s25 + $0x100] sm:%s17] %v90
            %v92 = vld [vmem:[%s24 + $0x128] sm:%s17]
            %93 = vst [vmem:[%s25 + $0x108] sm:%s17] %v92
            %v94 = vld [vmem:[%s24 + $0x130] sm:%s17]
            %95 = vst [vmem:[%s25 + $0x110] sm:%s17] %v94
            %v96 = vld [vmem:[%s24 + $0x138] sm:%s17]
            %97 = vst [vmem:[%s25 + $0x118] sm:%s17] %v96
            %v98 = vld [vmem:[%s24 + $0x140] sm:%s17]
            %99 = vst [vmem:[%s25 + $0x120] sm:%s17] %v98
            %v100 = vld [vmem:[%s24 + $0x148] sm:%s17]
            %101 = vst [vmem:[%s25 + $0x128] sm:%s17] %v100
            %v102 = vld [vmem:[%s24 + $0x150] sm:%s17]
            %103 = vst [vmem:[%s25 + $0x130] sm:%s17] %v102
            %v104 = vld [vmem:[%s24 + $0x158] sm:%s17]
            %105 = vst [vmem:[%s25 + $0x138] sm:%s17] %v104
            %v106 = vld [vmem:[%s24 + $0x160] sm:%s17]
            %107 = vst [vmem:[%s25 + $0x140] sm:%s17] %v106
            %v108 = vld [vmem:[%s24 + $0x168] sm:%s17]
            %109 = vst [vmem:[%s25 + $0x148] sm:%s17] %v108
            %v110 = vld [vmem:[%s24 + $0x170] sm:%s17]
            %111 = vst [vmem:[%s25 + $0x150] sm:%s17] %v110
            %v112 = vld [vmem:[%s24 + $0x178] sm:%s17]
            %113 = vst [vmem:[%s25 + $0x158] sm:%s17] %v112
            %v114 = vld [vmem:[%s24 + $0x180] sm:%s17]
            %115 = vst [vmem:[%s25 + $0x160] sm:%s17] %v114
            %v116 = vld [vmem:[%s24 + $0x188] sm:%s17]
            %117 = vst [vmem:[%s25 + $0x168] sm:%s17] %v116
            %v118 = vld [vmem:[%s24 + $0x190] sm:%s17]
            %119 = vst [vmem:[%s25 + $0x170] sm:%s17] %v118
            %v120 = vld [vmem:[%s24 + $0x198] sm:%s17]
            %121 = vst [vmem:[%s25 + $0x178] sm:%s17] %v120
            %v122 = vld [vmem:[%s24 + $0x1b0] sm:%s17]
            %123 = vst [vmem:[%s25 + $0x180] sm:%s17] %v122
            %v124 = vld [vmem:[%s24 + $0x1b8] sm:%s17]
            %125 = vst [vmem:[%s25 + $0x188] sm:%s17] %v124
            %v126 = vld [vmem:[%s24 + $0x1c0] sm:%s17]
            %127 = vst [vmem:[%s25 + $0x190] sm:%s17] %v126
            %v128 = vld [vmem:[%s24 + $0x1c8] sm:%s17]
            %129 = vst [vmem:[%s25 + $0x198] sm:%s17] %v128
            %v130 = vld [vmem:[%s24 + $0x1d0] sm:%s17]
            %131 = vst [vmem:[%s25 + $0x1a0] sm:%s17] %v130
            %v132 = vld [vmem:[%s24 + $0x1d8] sm:%s17]
            %133 = vst [vmem:[%s25 + $0x1a8] sm:%s17] %v132
            %v134 = vld [vmem:[%s24 + $0x1e0] sm:%s17]
            %135 = vst [vmem:[%s25 + $0x1b0] sm:%s17] %v134
            %v136 = vld [vmem:[%s24 + $0x1e8] sm:%s17]
            %137 = vst [vmem:[%s25 + $0x1b8] sm:%s17] %v136
            %v138 = vld [vmem:[%s24 + $0x1f0] sm:%s17]
            %139 = vst [vmem:[%s25 + $0x1c0] sm:%s17] %v138
            %v140 = vld [vmem:[%s24 + $0x1f8] sm:%s17]
            %141 = vst [vmem:[%s25 + $0x1c8] sm:%s17] %v140
            %v142 = vld [vmem:[%s24 + $0x200] sm:%s17]
            %143 = vst [vmem:[%s25 + $0x1d0] sm:%s17] %v142
            %v144 = vld [vmem:[%s24 + $0x208] sm:%s17]
            %145 = vst [vmem:[%s25 + $0x1d8] sm:%s17] %v144
            %v146 = vld [vmem:[%s24 + $0x210] sm:%s17]
            %147 = vst [vmem:[%s25 + $0x1e0] sm:%s17] %v146
            %v148 = vld [vmem:[%s24 + $0x218] sm:%s17]
            %149 = vst [vmem:[%s25 + $0x1e8] sm:%s17] %v148
            %v150 = vld [vmem:[%s24 + $0x220] sm:%s17]
            %151 = vst [vmem:[%s25 + $0x1f0] sm:%s17] %v150
            %v152 = vld [vmem:[%s24 + $0x228] sm:%s17]
            %153 = vst [vmem:[%s25 + $0x1f8] sm:%s17] %v152
          $region22: #{tpu_custom_call.1} parent=16 // loop_footer
            %s23 = sadd.s32 1, %s19
          $region23: #{tpu_custom_call.1} parent=16 // loop_footer_branch
            %18 = sbr.rel target = $region19
          $region24: #{tpu_custom_call.1} parent=16 // loop_exit
            _
        $region17: #{tpu_custom_call.1} parent=8 // pred_fallthru
          _
      $region9: #{tpu_custom_call.1} parent=4 // pred_fallthru
        _
      %294 = vnop
    $region5: #{tpu_custom_call.1} parent=1 // pred_fallthru
      _
    // Predicated region
    $region40: #{tpu_custom_call.1} parent=1 // pred_check
      _
    $region41: #{tpu_custom_call.1} parent=1 // pred_check_branch
      %296 = sbr.rel (0) target = $region43
    $region42: #{tpu_custom_call.1} parent=1 // pred_region
      %s297 = sadd.s32 0, 1
      %s298 = smul.u32 %s297, 8
      %s299 = smul.addr %s298, 2
      %s300 = smul.addr %s299, 8
      %s301 = scalar_lea.vmem %s1, %s300
      // Predicated region
      $region44: #{tpu_custom_call.1} parent=42 // pred_check
        _
      $region45: #{tpu_custom_call.1} parent=42 // pred_check_branch
        %303 = sbr.rel (0) target = $region47
      $region46: #{tpu_custom_call.1} parent=42 // pred_region
        // Predicated region
        $region48: #{tpu_custom_call.1} parent=46 // pred_check
          _
        $region49: #{tpu_custom_call.1} parent=46 // pred_check_branch
          %305 = sbr.rel (0) target = $region51
        $region50: #{tpu_custom_call.1} parent=46 // pred_region
          // Predicated region
          $region63: #{tpu_custom_call.1} parent=50 // pred_check
            _
          $region64: #{tpu_custom_call.1} parent=50 // pred_check_branch
            %335 = sbr.rel (0) target = $region66
          $region65: #{tpu_custom_call.1} parent=50 // pred_region
            loop: start=0, step=1, limit=1
            $region67: #{tpu_custom_call.1} parent=65 // loop_pre_header
              _
            $region68: #{tpu_custom_call.1} parent=65 // loop_header
              %s337 = sphi 0, %s341
              %p338 = scmp.ge.s32.totalorder %s337, 1
              %s342 = sphi %s301, %s301
              %s343 = sphi [#allocation3], [#allocation3]
            $region69: #{tpu_custom_call.1} parent=65 // loop_header_branch
              %340 = sbr.rel (%p338) target = $region73
            $region70: #{tpu_custom_call.1} parent=65 // loop_body
              %v344 = vld [vmem:[%s342] sm:$0xff]
              %345 = vst [vmem:[%s343] sm:$0xff] %v344
              %v346 = vld [vmem:[%s342 + $0x8] sm:$0xff]
              %347 = vst [vmem:[%s343 + $0x8] sm:$0xff] %v346
              %v348 = vld [vmem:[%s342 + $0x90] sm:$0xff]
              %349 = vst [vmem:[%s343 + $0x10] sm:$0xff] %v348
              %v350 = vld [vmem:[%s342 + $0x98] sm:$0xff]
              %351 = vst [vmem:[%s343 + $0x18] sm:$0xff] %v350
              %v352 = vld [vmem:[%s342 + $0x120] sm:$0xff]
              %353 = vst [vmem:[%s343 + $0x20] sm:$0xff] %v352
              %v354 = vld [vmem:[%s342 + $0x128] sm:$0xff]
              %355 = vst [vmem:[%s343 + $0x28] sm:$0xff] %v354
              %v356 = vld [vmem:[%s342 + $0x1b0] sm:$0xff]
              %357 = vst [vmem:[%s343 + $0x30] sm:$0xff] %v356
              %v358 = vld [vmem:[%s342 + $0x1b8] sm:$0xff]
              %359 = vst [vmem:[%s343 + $0x38] sm:$0xff] %v358
            $region71: #{tpu_custom_call.1} parent=65 // loop_footer
              %s341 = sadd.s32 1, %s337
            $region72: #{tpu_custom_call.1} parent=65 // loop_footer_branch
              %336 = sbr.rel target = $region68
            $region73: #{tpu_custom_call.1} parent=65 // loop_exit
              _
          $region66: #{tpu_custom_call.1} parent=50 // pred_fallthru
            _
          // Predicated region
          $region74: #{tpu_custom_call.1} parent=50 // pred_check
            _
          $region75: #{tpu_custom_call.1} parent=50 // pred_check_branch
            %361 = sbr.rel target = $region77
          $region76: #{tpu_custom_call.1} parent=50 // pred_region
            _
          $region77: #{tpu_custom_call.1} parent=50 // pred_fallthru
            _
        $region51: #{tpu_custom_call.1} parent=46 // pred_fallthru
          _
        // Predicated region
        $region52: #{tpu_custom_call.1} parent=46 // pred_check
          _
        $region53: #{tpu_custom_call.1} parent=46 // pred_check_branch
          %307 = sbr.rel target = $region55
        $region54: #{tpu_custom_call.1} parent=46 // pred_region
          %s309 = ssub.s32 256, 1
          loop: start=0, step=1, limit=1
          $region56: #{tpu_custom_call.1} parent=54 // loop_pre_header
            _
          $region57: #{tpu_custom_call.1} parent=54 // loop_header
            %s311 = sphi 0, %s315
            %p312 = scmp.ge.s32.totalorder %s311, 1
            %s316 = sphi %s301, %s301
            %s317 = sphi [#allocation3], [#allocation3]
          $region58: #{tpu_custom_call.1} parent=54 // loop_header_branch
            %314 = sbr.rel (%p312) target = $region62
          $region59: #{tpu_custom_call.1} parent=54 // loop_body
            %v318 = vld [vmem:[%s316] sm:%s309]
            %319 = vst [vmem:[%s317] sm:%s309] %v318
            %v320 = vld [vmem:[%s316 + $0x8] sm:%s309]
            %321 = vst [vmem:[%s317 + $0x8] sm:%s309] %v320
            %v322 = vld [vmem:[%s316 + $0x90] sm:%s309]
            %323 = vst [vmem:[%s317 + $0x10] sm:%s309] %v322
            %v324 = vld [vmem:[%s316 + $0x98] sm:%s309]
            %325 = vst [vmem:[%s317 + $0x18] sm:%s309] %v324
            %v326 = vld [vmem:[%s316 + $0x120] sm:%s309]
            %327 = vst [vmem:[%s317 + $0x20] sm:%s309] %v326
            %v328 = vld [vmem:[%s316 + $0x128] sm:%s309]
            %329 = vst [vmem:[%s317 + $0x28] sm:%s309] %v328
            %v330 = vld [vmem:[%s316 + $0x1b0] sm:%s309]
            %331 = vst [vmem:[%s317 + $0x30] sm:%s309] %v330
            %v332 = vld [vmem:[%s316 + $0x1b8] sm:%s309]
            %333 = vst [vmem:[%s317 + $0x38] sm:%s309] %v332
          $region60: #{tpu_custom_call.1} parent=54 // loop_footer
            %s315 = sadd.s32 1, %s311
          $region61: #{tpu_custom_call.1} parent=54 // loop_footer_branch
            %310 = sbr.rel target = $region57
          $region62: #{tpu_custom_call.1} parent=54 // loop_exit
            _
        $region55: #{tpu_custom_call.1} parent=46 // pred_fallthru
          _
      $region47: #{tpu_custom_call.1} parent=42 // pred_fallthru
        _
      %362 = vnop
    $region43: #{tpu_custom_call.1} parent=1 // pred_fallthru
      _
    // Predicated region
    $region78: #{tpu_custom_call.1} parent=1 // pred_check
      _
    $region79: #{tpu_custom_call.1} parent=1 // pred_check_branch
      %364 = sbr.rel (0) target = $region81
    $region80: #{tpu_custom_call.1} parent=1 // pred_region
      _
    $region81: #{tpu_custom_call.1} parent=1 // pred_fallthru
      _
    // Predicated region
    $region82: #{tpu_custom_call.1} parent=1 // pred_check
      _
    $region83: #{tpu_custom_call.1} parent=1 // pred_check_branch
      %366 = sbr.rel (0) target = $region85
    $region84: #{tpu_custom_call.1} parent=1 // pred_region
      _
    $region85: #{tpu_custom_call.1} parent=1 // pred_fallthru
      _
    %s367 = sadd.s32 0, 1
    %s368 = smul.u32 %s367, 8
    %v369 = vld [vmem:[#allocation2] sm:$0xff]
    %v370 = vld [vmem:[#allocation2 + $0x8] sm:$0x1]
    %v371 = vld [vmem:[#allocation2 + $0x10] sm:$0xff]
    %v372 = vld [vmem:[#allocation2 + $0x18] sm:$0x1]
    %v373 = vld [vmem:[#allocation2 + $0x20] sm:$0xff]
    %v374 = vld [vmem:[#allocation2 + $0x28] sm:$0x1]
    %v375 = vld [vmem:[#allocation2 + $0x30] sm:$0xff]
    %v376 = vld [vmem:[#allocation2 + $0x38] sm:$0x1]
    %v377 = vld [vmem:[#allocation2 + $0x40] sm:$0xff]
    %v378 = vld [vmem:[#allocation2 + $0x48] sm:$0x1]
    %v379 = vld [vmem:[#allocation2 + $0x50] sm:$0xff]
    %v380 = vld [vmem:[#allocation2 + $0x58] sm:$0x1]
    %v381 = vld [vmem:[#allocation2 + $0x60] sm:$0xff]
    %v382 = vld [vmem:[#allocation2 + $0x68] sm:$0x1]
    %v383 = vld [vmem:[#allocation2 + $0x70] sm:$0xff]
    %v384 = vld [vmem:[#allocation2 + $0x78] sm:$0x1]
    %s385 = scalar_lea.vmem [#allocation2], 128
    %v386 = vld [vmem:[%s385] sm:$0xff]
    %v387 = vld [vmem:[%s385 + $0x8] sm:$0x1]
    %v388 = vld [vmem:[%s385 + $0x10] sm:$0xff]
    %v389 = vld [vmem:[%s385 + $0x18] sm:$0x1]
    %v390 = vld [vmem:[%s385 + $0x20] sm:$0xff]
    %v391 = vld [vmem:[%s385 + $0x28] sm:$0x1]
    %v392 = vld [vmem:[%s385 + $0x30] sm:$0xff]
    %v393 = vld [vmem:[%s385 + $0x38] sm:$0x1]
    %v394 = vld [vmem:[%s385 + $0x40] sm:$0xff]
    %v395 = vld [vmem:[%s385 + $0x48] sm:$0x1]
    %v396 = vld [vmem:[%s385 + $0x50] sm:$0xff]
    %v397 = vld [vmem:[%s385 + $0x58] sm:$0x1]
    %v398 = vld [vmem:[%s385 + $0x60] sm:$0xff]
    %v399 = vld [vmem:[%s385 + $0x68] sm:$0x1]
    %v400 = vld [vmem:[%s385 + $0x70] sm:$0xff]
    %v401 = vld [vmem:[%s385 + $0x78] sm:$0x1]
    %vm418 = vcmask 1046528
    %v419 = vrot.slane %v386, 1
    %v420 = vrot.slane %v387, 1
    %v421 = vsel %vm418, %v419, %v420
    %v422 = vrot.slane %v388, 1
    %v423 = vrot.slane %v389, 1
    %v424 = vsel %vm418, %v422, %v423
    %v425 = vrot.slane %v390, 1
    %v426 = vrot.slane %v391, 1
    %v427 = vsel %vm418, %v425, %v426
    %v428 = vrot.slane %v392, 1
    %v429 = vrot.slane %v393, 1
    %v430 = vsel %vm418, %v428, %v429
    %v431 = vrot.slane %v394, 1
    %v432 = vrot.slane %v395, 1
    %v433 = vsel %vm418, %v431, %v432
    %v434 = vrot.slane %v396, 1
    %v435 = vrot.slane %v397, 1
    %v436 = vsel %vm418, %v434, %v435
    %v437 = vrot.slane %v398, 1
    %v438 = vrot.slane %v399, 1
    %v439 = vsel %vm418, %v437, %v438
    %v440 = vrot.slane %v400, 1
    %v441 = vrot.slane %v401, 1
    %v442 = vsel %vm418, %v440, %v441
    %v451 = vadd.f32 %v369, %v421
    %v452 = vadd.f32 %v371, %v424
    %v453 = vadd.f32 %v373, %v427
    %v454 = vadd.f32 %v375, %v430
    %v455 = vadd.f32 %v377, %v433
    %v456 = vadd.f32 %v379, %v436
    %v457 = vadd.f32 %v381, %v439
    %v458 = vadd.f32 %v383, %v442
    %v475 = vrot.slane %v369, 1
    %v476 = vrot.slane %v370, 1
    %v477 = vsel %vm418, %v475, %v476
    %v478 = vrot.slane %v371, 1
    %v479 = vrot.slane %v372, 1
    %v480 = vsel %vm418, %v478, %v479
    %v481 = vrot.slane %v373, 1
    %v482 = vrot.slane %v374, 1
    %v483 = vsel %vm418, %v481, %v482
    %v484 = vrot.slane %v375, 1
    %v485 = vrot.slane %v376, 1
    %v486 = vsel %vm418, %v484, %v485
    %v487 = vrot.slane %v377, 1
    %v488 = vrot.slane %v378, 1
    %v489 = vsel %vm418, %v487, %v488
    %v490 = vrot.slane %v379, 1
    %v491 = vrot.slane %v380, 1
    %v492 = vsel %vm418, %v490, %v491
    %v493 = vrot.slane %v381, 1
    %v494 = vrot.slane %v382, 1
    %v495 = vsel %vm418, %v493, %v494
    %v496 = vrot.slane %v383, 1
    %v497 = vrot.slane %v384, 1
    %v498 = vsel %vm418, %v496, %v497
    %v507 = vadd.f32 %v386, %v477
    %v508 = vadd.f32 %v388, %v480
    %v509 = vadd.f32 %v390, %v483
    %v510 = vadd.f32 %v392, %v486
    %v511 = vadd.f32 %v394, %v489
    %v512 = vadd.f32 %v396, %v492
    %v513 = vadd.f32 %v398, %v495
    %v514 = vadd.f32 %v400, %v498
    %v515 = vmul.f32 %v507, 3.0
    %v516 = vmul.f32 %v508, 3.0
    %v517 = vmul.f32 %v509, 3.0
    %v518 = vmul.f32 %v510, 3.0
    %v519 = vmul.f32 %v511, 3.0
    %v520 = vmul.f32 %v512, 3.0
    %v521 = vmul.f32 %v513, 3.0
    %v522 = vmul.f32 %v514, 3.0
    %v523 = vadd.f32 %v451, %v515
    %v524 = vadd.f32 %v452, %v516
    %v525 = vadd.f32 %v453, %v517
    %v526 = vadd.f32 %v454, %v518
    %v527 = vadd.f32 %v455, %v519
    %v528 = vadd.f32 %v456, %v520
    %v529 = vadd.f32 %v457, %v521
    %v530 = vadd.f32 %v458, %v522
    %s531 = scalar_lea.vmem [#allocation2], 256
    %v532 = vld [vmem:[%s531] sm:$0xff]
    %v533 = vld [vmem:[%s531 + $0x8] sm:$0x1]
    %v534 = vld [vmem:[%s531 + $0x10] sm:$0xff]
    %v535 = vld [vmem:[%s531 + $0x18] sm:$0x1]
    %v536 = vld [vmem:[%s531 + $0x20] sm:$0xff]
    %v537 = vld [vmem:[%s531 + $0x28] sm:$0x1]
    %v538 = vld [vmem:[%s531 + $0x30] sm:$0xff]
    %v539 = vld [vmem:[%s531 + $0x38] sm:$0x1]
    %v540 = vld [vmem:[%s531 + $0x40] sm:$0xff]
    %v541 = vld [vmem:[%s531 + $0x48] sm:$0x1]
    %v542 = vld [vmem:[%s531 + $0x50] sm:$0xff]
    %v543 = vld [vmem:[%s531 + $0x58] sm:$0x1]
    %v544 = vld [vmem:[%s531 + $0x60] sm:$0xff]
    %v545 = vld [vmem:[%s531 + $0x68] sm:$0x1]
    %v546 = vld [vmem:[%s531 + $0x70] sm:$0xff]
    %v547 = vld [vmem:[%s531 + $0x78] sm:$0x1]
    %s548 = scalar_lea.vmem [#allocation2], 384
    %v549 = vld [vmem:[%s548] sm:$0xff]
    %v550 = vld [vmem:[%s548 + $0x8] sm:$0x1]
    %v551 = vld [vmem:[%s548 + $0x10] sm:$0xff]
    %v552 = vld [vmem:[%s548 + $0x18] sm:$0x1]
    %v553 = vld [vmem:[%s548 + $0x20] sm:$0xff]
    %v554 = vld [vmem:[%s548 + $0x28] sm:$0x1]
    %v555 = vld [vmem:[%s548 + $0x30] sm:$0xff]
    %v556 = vld [vmem:[%s548 + $0x38] sm:$0x1]
    %v557 = vld [vmem:[%s548 + $0x40] sm:$0xff]
    %v558 = vld [vmem:[%s548 + $0x48] sm:$0x1]
    %v559 = vld [vmem:[%s548 + $0x50] sm:$0xff]
    %v560 = vld [vmem:[%s548 + $0x58] sm:$0x1]
    %v561 = vld [vmem:[%s548 + $0x60] sm:$0xff]
    %v562 = vld [vmem:[%s548 + $0x68] sm:$0x1]
    %v563 = vld [vmem:[%s548 + $0x70] sm:$0xff]
    %v564 = vld [vmem:[%s548 + $0x78] sm:$0x1]
    %v581 = vrot.slane %v549, 1
    %v582 = vrot.slane %v550, 1
    %v583 = vsel %vm418, %v581, %v582
    %v584 = vrot.slane %v551, 1
    %v585 = vrot.slane %v552, 1
    %v586 = vsel %vm418, %v584, %v585
    %v587 = vrot.slane %v553, 1
    %v588 = vrot.slane %v554, 1
    %v589 = vsel %vm418, %v587, %v588
    %v590 = vrot.slane %v555, 1
    %v591 = vrot.slane %v556, 1
    %v592 = vsel %vm418, %v590, %v591
    %v593 = vrot.slane %v557, 1
    %v594 = vrot.slane %v558, 1
    %v595 = vsel %vm418, %v593, %v594
    %v596 = vrot.slane %v559, 1
    %v597 = vrot.slane %v560, 1
    %v598 = vsel %vm418, %v596, %v597
    %v599 = vrot.slane %v561, 1
    %v600 = vrot.slane %v562, 1
    %v601 = vsel %vm418, %v599, %v600
    %v602 = vrot.slane %v563, 1
    %v603 = vrot.slane %v564, 1
    %v604 = vsel %vm418, %v602, %v603
    %v613 = vadd.f32 %v532, %v583
    %v614 = vadd.f32 %v534, %v586
    %v615 = vadd.f32 %v536, %v589
    %v616 = vadd.f32 %v538, %v592
    %v617 = vadd.f32 %v540, %v595
    %v618 = vadd.f32 %v542, %v598
    %v619 = vadd.f32 %v544, %v601
    %v620 = vadd.f32 %v546, %v604
    %v637 = vrot.slane %v532, 1
    %v638 = vrot.slane %v533, 1
    %v639 = vsel %vm418, %v637, %v638
    %v640 = vrot.slane %v534, 1
    %v641 = vrot.slane %v535, 1
    %v642 = vsel %vm418, %v640, %v641
    %v643 = vrot.slane %v536, 1
    %v644 = vrot.slane %v537, 1
    %v645 = vsel %vm418, %v643, %v644
    %v646 = vrot.slane %v538, 1
    %v647 = vrot.slane %v539, 1
    %v648 = vsel %vm418, %v646, %v647
    %v649 = vrot.slane %v540, 1
    %v650 = vrot.slane %v541, 1
    %v651 = vsel %vm418, %v649, %v650
    %v652 = vrot.slane %v542, 1
    %v653 = vrot.slane %v543, 1
    %v654 = vsel %vm418, %v652, %v653
    %v655 = vrot.slane %v544, 1
    %v656 = vrot.slane %v545, 1
    %v657 = vsel %vm418, %v655, %v656
    %v658 = vrot.slane %v546, 1
    %v659 = vrot.slane %v547, 1
    %v660 = vsel %vm418, %v658, %v659
    %v669 = vadd.f32 %v549, %v639
    %v670 = vadd.f32 %v551, %v642
    %v671 = vadd.f32 %v553, %v645
    %v672 = vadd.f32 %v555, %v648
    %v673 = vadd.f32 %v557, %v651
    %v674 = vadd.f32 %v559, %v654
    %v675 = vadd.f32 %v561, %v657
    %v676 = vadd.f32 %v563, %v660
    %v677 = vmul.f32 %v669, 3.0
    %v678 = vmul.f32 %v670, 3.0
    %v679 = vmul.f32 %v671, 3.0
    %v680 = vmul.f32 %v672, 3.0
    %v681 = vmul.f32 %v673, 3.0
    %v682 = vmul.f32 %v674, 3.0
    %v683 = vmul.f32 %v675, 3.0
    %v684 = vmul.f32 %v676, 3.0
    %v685 = vadd.f32 %v613, %v677
    %v686 = vadd.f32 %v614, %v678
    %v687 = vadd.f32 %v615, %v679
    %v688 = vadd.f32 %v616, %v680
    %v689 = vadd.f32 %v617, %v681
    %v690 = vadd.f32 %v618, %v682
    %v691 = vadd.f32 %v619, %v683
    %v692 = vadd.f32 %v620, %v684
    %v693 = vld [vmem:[#allocation3] sm:$0xff]
    %v694 = vld [vmem:[#allocation3 + $0x8] sm:$0x1]
    %s695 = scalar_lea.vmem [#allocation3], 16
    %v696 = vld [vmem:[%s695] sm:$0xff]
    %v697 = vld [vmem:[%s695 + $0x8] sm:$0x1]
    %v700 = vrot.slane %v696, 1
    %v701 = vrot.slane %v697, 1
    %v702 = vsel %vm418, %v700, %v701
    %v704 = vadd.f32 %v693, %v702
    %v707 = vrot.slane %v693, 1
    %v708 = vrot.slane %v694, 1
    %v709 = vsel %vm418, %v707, %v708
    %v711 = vadd.f32 %v696, %v709
    %v712 = vmul.f32 %v711, 3.0
    %v713 = vadd.f32 %v704, %v712
    %s714 = scalar_lea.vmem [#allocation3], 32
    %v715 = vld [vmem:[%s714] sm:$0xff]
    %v716 = vld [vmem:[%s714 + $0x8] sm:$0x1]
    %s717 = scalar_lea.vmem [#allocation3], 48
    %v718 = vld [vmem:[%s717] sm:$0xff]
    %v719 = vld [vmem:[%s717 + $0x8] sm:$0x1]
    %v722 = vrot.slane %v718, 1
    %v723 = vrot.slane %v719, 1
    %v724 = vsel %vm418, %v722, %v723
    %v726 = vadd.f32 %v715, %v724
    %v729 = vrot.slane %v715, 1
    %v730 = vrot.slane %v716, 1
    %v731 = vsel %vm418, %v729, %v730
    %v733 = vadd.f32 %v718, %v731
    %v734 = vmul.f32 %v733, 3.0
    %v735 = vadd.f32 %v726, %v734
    %v736 = vadd.f32 %v523, %v686
    %v737 = vadd.f32 %v524, %v687
    %v738 = vadd.f32 %v525, %v688
    %v739 = vadd.f32 %v526, %v689
    %v740 = vadd.f32 %v527, %v690
    %v741 = vadd.f32 %v528, %v691
    %v742 = vadd.f32 %v529, %v692
    %v743 = vadd.f32 %v685, %v524
    %v744 = vadd.f32 %v686, %v525
    %v745 = vadd.f32 %v687, %v526
    %v746 = vadd.f32 %v688, %v527
    %v747 = vadd.f32 %v689, %v528
    %v748 = vadd.f32 %v690, %v529
    %v749 = vadd.f32 %v691, %v530
    %v750 = vmul.f32 %v743, 3.0
    %v751 = vmul.f32 %v744, 3.0
    %v752 = vmul.f32 %v745, 3.0
    %v753 = vmul.f32 %v746, 3.0
    %v754 = vmul.f32 %v747, 3.0
    %v755 = vmul.f32 %v748, 3.0
    %v756 = vmul.f32 %v749, 3.0
    %v757 = vadd.f32 %v736, %v750
    %v758 = vadd.f32 %v737, %v751
    %v759 = vadd.f32 %v738, %v752
    %v760 = vadd.f32 %v739, %v753
    %v761 = vadd.f32 %v740, %v754
    %v762 = vadd.f32 %v741, %v755
    %v763 = vadd.f32 %v742, %v756
    %v764 = vmul.f32 %v757, 0.015625
    %v765 = vmul.f32 %v758, 0.015625
    %v766 = vmul.f32 %v759, 0.015625
    %v767 = vmul.f32 %v760, 0.015625
    %v768 = vmul.f32 %v761, 0.015625
    %v769 = vmul.f32 %v762, 0.015625
    %v770 = vmul.f32 %v763, 0.015625
    %vm771 = vcmask 64512
    %772 = vst.msk [vmem:[#allocation4] sm:$0xff] %vm771, %v764
    %773 = vst.msk [vmem:[#allocation4 + $0x8] sm:$0xff] %vm771, %v765
    %774 = vst.msk [vmem:[#allocation4 + $0x10] sm:$0xff] %vm771, %v766
    %775 = vst.msk [vmem:[#allocation4 + $0x18] sm:$0xff] %vm771, %v767
    %776 = vst.msk [vmem:[#allocation4 + $0x20] sm:$0xff] %vm771, %v768
    %777 = vst.msk [vmem:[#allocation4 + $0x28] sm:$0xff] %vm771, %v769
    %778 = vst.msk [vmem:[#allocation4 + $0x30] sm:$0xff] %vm771, %v770
    %v779 = vadd.f32 %v530, %v735
    %v780 = vadd.f32 %v692, %v713
    %v781 = vmul.f32 %v780, 3.0
    %v782 = vadd.f32 %v779, %v781
    %v783 = vmul.f32 %v782, 0.015625
    %s784 = scalar_lea.vmem [#allocation4], 56
    %785 = vst.msk [vmem:[%s784] sm:$0xff] %vm771, %v783
    // Predicated region
    $region86: #{tpu_custom_call.1} parent=1 // pred_check
      _
    $region87: #{tpu_custom_call.1} parent=1 // pred_check_branch
      %787 = sbr.rel (0) target = $region89
    $region88: #{tpu_custom_call.1} parent=1 // pred_region
      %789 = vsyncadd [#allocation5], 0
      %s790 = sshll.u32 [#allocation4], 4
      %s791 = int_to_ptr.vmem [resolvable:$true] %s790
      %s792 = sshll.u32 %s2, 4
      %s793 = int_to_ptr.hbm [resolvable:$true] %s792
      %798 = dma.vmem_to_hbm [thread:$0]  %s791, 1024, %s793, [#allocation5], 128, 128, 8
    $region89: #{tpu_custom_call.1} parent=1 // pred_fallthru
      _
    // Predicated region
    $region90: #{tpu_custom_call.1} parent=1 // pred_check
      _
    $region91: #{tpu_custom_call.1} parent=1 // pred_check_branch
      %800 = sbr.rel (0) target = $region93
    $region92: #{tpu_custom_call.1} parent=1 // pred_region
      %802 = dma.done [#allocation5], 1024
    $region93: #{tpu_custom_call.1} parent=1 // pred_fallthru
      _
    %803 = vsyncpa [#allocation5], 1

</llo_original>
